<compile_context>
chip_gen: v7x
topology: tpu7x:2x2x1
jax: 0.10.0
libtpu: 0.0.40
codegen_flags: <defaults>
</compile_context>

<pallas_src>
import jax
import jax.numpy as jnp
import numpy as np
from jax.experimental import pallas as pl
from jax.experimental.pallas import tpu as pltpu

EPS = 1e-5


def _bn_relu(h, relu):
    """BatchNorm1d(affine=False), training mode, in f32. Full batch resident."""
    mu = jnp.mean(h, axis=0, keepdims=True)
    c = h - mu                                    # center once, reuse
    var = jnp.mean(c * c, axis=0, keepdims=True)  # biased variance
    h = c * jax.lax.rsqrt(var + EPS)
    if relu:
        h = jnp.maximum(h, 0.0)
    return h


def _fused_projection_kernel(x_ref, wn_ref, bnb_ref,
                             w1_ref, b1_ref, w2_ref, b2_ref, w3_ref, b3_ref,
                             proj_ref, rep_ref):
    """Fused: rep = x@Wn+bn ; proj = BN(ReLU(BN(ReLU(BN(rep@W1+b1))@W2+b2))@W3+b3)."""
    f32, bf16 = jnp.float32, jnp.bfloat16

    # ---- base net: Linear(D_in -> net_final) ----
    rep = jnp.dot(x_ref[...], wn_ref[...], preferred_element_type=f32)
    rep = rep + bnb_ref[...].astype(f32)
    rep_ref[...] = rep                                     # f32 representation out

    # ---- projector layer 1: Linear + BN + ReLU ----
    h = jnp.dot(rep.astype(bf16), w1_ref[...], preferred_element_type=f32)
    h = _bn_relu(h + b1_ref[...].astype(f32), relu=True)

    # ---- projector layer 2: Linear + BN + ReLU ----
    h = jnp.dot(h.astype(bf16), w2_ref[...], preferred_element_type=f32)
    h = _bn_relu(h + b2_ref[...].astype(f32), relu=True)

    # ---- projector layer 3: Linear + BN ----
    h = jnp.dot(h.astype(bf16), w3_ref[...], preferred_element_type=f32)
    h = _bn_relu(h + b3_ref[...].astype(f32), relu=False)

    proj_ref[...] = h                                      # f32 projection out


def projection_wrapper_forward(x, params):
    """Returns (projection, representation), matching ProjectionWrapper.forward."""
    bf16 = jnp.bfloat16
    B, D_in = x.shape
    N_net = params["wn"].shape[1]
    N_h = params["w1"].shape[1]
    N_proj = params["w3"].shape[1]

    # TPU-alignment / exact-BN preconditions (full batch resident, 128-lane dims).
    assert B % 8 == 0, "batch must be a multiple of 8 sublanes"
    for d in (D_in, N_net, N_h, N_proj):
        assert d % 128 == 0, "feature dims must be multiples of 128"
    assert N_proj == N_h, "reference module only runs when projection_size == hidden_size"

    args = (
        x.astype(bf16),
        params["wn"].astype(bf16), params["bn"],
        params["w1"].astype(bf16), params["b1"],
        params["w2"].astype(bf16), params["b2"],
        params["w3"].astype(bf16), params["b3"],
    )

    # Advisory cost estimate so XLA schedules the surrounding casts sensibly.
    flops = 2 * B * (D_in * N_net + N_net * N_h + N_h * N_h + N_h * N_proj)
    transcendentals = 2 * N_h + N_proj                      # one rsqrt per BN feature
    bytes_accessed = (sum(int(np.prod(a.shape)) * a.dtype.itemsize for a in args)
                      + B * (N_net + N_proj) * 4)

    # VMEM budget from the actual footprint (inputs + outputs + f32 activations),
    # clamped well under v7x's 64 MiB physical VMEM.
    interm_bytes = B * (N_net + 2 * N_h + N_proj) * 4
    vmem_limit = int(min(max(4 * (bytes_accessed + interm_bytes), 8 << 20), 48 << 20))

    vmem_spec = pl.BlockSpec(memory_space=pltpu.MemorySpace.VMEM)
    proj, rep = pl.pallas_call(
        _fused_projection_kernel,
        out_shape=(jax.ShapeDtypeStruct((B, N_proj), jnp.float32),
                   jax.ShapeDtypeStruct((B, N_net), jnp.float32)),
        in_specs=[vmem_spec] * len(args),
        out_specs=(vmem_spec, vmem_spec),
        compiler_params=pltpu.CompilerParams(vmem_limit_bytes=vmem_limit),
        cost_estimate=pl.CostEstimate(flops=flops,
                                      transcendentals=transcendentals,
                                      bytes_accessed=bytes_accessed),
    )(*args)
    return proj, rep


def init_linear(key, fan_in, fan_out):
    # PyTorch nn.Linear default init: U(-1/sqrt(fan_in), 1/sqrt(fan_in)).
    kw, kb = jax.random.split(key)
    bound = 1.0 / jnp.sqrt(fan_in)
    w = jax.random.uniform(kw, (fan_in, fan_out), jnp.float32, -bound, bound)
    b = jax.random.uniform(kb, (1, fan_out), jnp.float32, -bound, bound)
    return w, b


def reference_forward(x, p):
    """Pure-JAX reference mirroring the kernel's bf16-matmul / f32-accumulate math."""
    f32, bf16 = jnp.float32, jnp.bfloat16

    def lin(h, w, b):
        return jnp.dot(h.astype(bf16).astype(f32), w.astype(bf16).astype(f32),
                       precision=jax.lax.Precision.HIGHEST) + b

    def bn(h, relu):
        mu = h.mean(0, keepdims=True)
        c = h - mu
        var = (c * c).mean(0, keepdims=True)
        h = c * jax.lax.rsqrt(var + EPS)
        return jnp.maximum(h, 0.0) if relu else h

    rep = lin(x, p["wn"], p["bn"])
    h = bn(lin(rep, p["w1"], p["b1"]), True)
    h = bn(lin(h, p["w2"], p["b2"]), True)
    proj = bn(lin(h, p["w3"], p["b3"]), False)
    return proj, rep


if __name__ == "__main__":
    # Small but TPU-aligned shapes: features are multiples of 128 lanes,
    # batch is a multiple of 8 sublanes (BatchNorm also needs batch > 1).
    B = 16           # batch
    D_IN = 128       # input feature size fed to the base net
    NET_FINAL = 128  # net_final_size
    HIDDEN = 256     # projection_hidden_size
    PROJ = 256       # projection_size (== hidden, see NOTE above)

    key = jax.random.PRNGKey(0)
    kx, kn, k1, k2, k3 = jax.random.split(key, 5)

    x = jax.random.normal(kx, (B, D_IN), jnp.float32)

    wn, bnb = init_linear(kn, D_IN, NET_FINAL)      # base net Linear
    w1, b1 = init_linear(k1, NET_FINAL, HIDDEN)     # projector Linear 1
    w2, b2 = init_linear(k2, HIDDEN, HIDDEN)        # projector Linear 2
    w3, b3 = init_linear(k3, HIDDEN, PROJ)          # projector Linear 3
    params = dict(wn=wn, bn=bnb, w1=w1, b1=b1, w2=w2, b2=b2, w3=w3, b3=b3)

    fwd = jax.jit(projection_wrapper_forward)
    proj, rep = jax.block_until_ready(fwd(x, params))

    ref_proj, ref_rep = reference_forward(x, params)
    assert proj.shape == (B, PROJ) and rep.shape == (B, NET_FINAL)
    assert jnp.allclose(rep, ref_rep, atol=2e-2, rtol=2e-2), \
        float(jnp.max(jnp.abs(rep - ref_rep)))
    assert jnp.allclose(proj, ref_proj, atol=2e-2, rtol=2e-2), \
        float(jnp.max(jnp.abs(proj - ref_proj)))

    print("KERNEL_OK")
</pallas_src>

<mosaic_0001>
module attributes {stable_mosaic.version = 11 : i64} {
  func.func @_fused_projection_kernel(%arg0: memref<16x128xbf16, #tpu.memory_space<vmem>>, %arg1: memref<128x128xbf16, #tpu.memory_space<vmem>>, %arg2: memref<1x128xf32, #tpu.memory_space<vmem>>, %arg3: memref<128x256xbf16, #tpu.memory_space<vmem>>, %arg4: memref<1x256xf32, #tpu.memory_space<vmem>>, %arg5: memref<256x256xbf16, #tpu.memory_space<vmem>>, %arg6: memref<1x256xf32, #tpu.memory_space<vmem>>, %arg7: memref<256x256xbf16, #tpu.memory_space<vmem>>, %arg8: memref<1x256xf32, #tpu.memory_space<vmem>>, %arg9: memref<16x256xf32, #tpu.memory_space<vmem>>, %arg10: memref<16x128xf32, #tpu.memory_space<vmem>>) attributes {dimension_semantics = [], scalar_prefetch = 0 : i64, scratch_operands = 0 : i64, tpu.core_type = #tpu.core_type<tc>} {
    %c0 = arith.constant 0 : index
    %c0_0 = arith.constant 0 : index
    %0 = vector.load %arg0[%c0, %c0_0] : memref<16x128xbf16, #tpu.memory_space<vmem>>, vector<16x128xbf16>
    %c0_1 = arith.constant 0 : index
    %c0_2 = arith.constant 0 : index
    %1 = vector.load %arg1[%c0_1, %c0_2] : memref<128x128xbf16, #tpu.memory_space<vmem>>, vector<128x128xbf16>
    %cst = arith.constant dense<0.000000e+00> : vector<16x128xf32>
    %2 = tpu.matmul %0, %1, %cst {dimension_numbers = #tpu.dot_dimension_numbers<[1], [0], [0], [1], [0, 0, 1, 1], [], []>} : vector<16x128xbf16>, vector<128x128xbf16>, vector<16x128xf32> -> vector<16x128xf32>
    %c0_3 = arith.constant 0 : index
    %c0_4 = arith.constant 0 : index
    %3 = vector.load %arg2[%c0_3, %c0_4] : memref<1x128xf32, #tpu.memory_space<vmem>>, vector<1x128xf32>
    %4 = vector.broadcast %3 : vector<1x128xf32> to vector<16x128xf32>
    %5 = arith.addf %2, %4 : vector<16x128xf32>
    %c0_5 = arith.constant 0 : index
    %c0_6 = arith.constant 0 : index
    %6 = vector.load %arg10[%c0_5, %c0_6] : memref<16x128xf32, #tpu.memory_space<vmem>>, vector<16x128xf32>
    tpu.vector_store %arg10[%c0_5, %c0_6], %5 {strides = array<i32>} : memref<16x128xf32, #tpu.memory_space<vmem>>, vector<16x128xf32>,
    %7 = arith.truncf %5 : vector<16x128xf32> to vector<16x128xbf16>
    %c0_7 = arith.constant 0 : index
    %c0_8 = arith.constant 0 : index
    %8 = vector.load %arg3[%c0_7, %c0_8] : memref<128x256xbf16, #tpu.memory_space<vmem>>, vector<128x256xbf16>
    %cst_9 = arith.constant dense<0.000000e+00> : vector<16x256xf32>
    %9 = tpu.matmul %7, %8, %cst_9 {dimension_numbers = #tpu.dot_dimension_numbers<[1], [0], [0], [1], [0, 0, 1, 1], [], []>} : vector<16x128xbf16>, vector<128x256xbf16>, vector<16x256xf32> -> vector<16x256xf32>
    %c0_10 = arith.constant 0 : index
    %c0_11 = arith.constant 0 : index
    %10 = vector.load %arg4[%c0_10, %c0_11] : memref<1x256xf32, #tpu.memory_space<vmem>>, vector<1x256xf32>
    %11 = vector.broadcast %10 : vector<1x256xf32> to vector<16x256xf32>
    %12 = arith.addf %9, %11 : vector<16x256xf32>
    %cst_12 = arith.constant dense<0.000000e+00> : vector<256xf32>
    %13 = vector.multi_reduction <add>, %12, %cst_12 [0] : vector<16x256xf32> to vector<256xf32>
    %14 = vector.shape_cast %13 : vector<256xf32> to vector<1x256xf32>
    %cst_13 = arith.constant 1.600000e+01 : f32
    %15 = vector.broadcast %cst_13 : f32 to vector<1x256xf32>
    %16 = arith.divf %14, %15 : vector<1x256xf32>
    %17 = vector.broadcast %16 : vector<1x256xf32> to vector<16x256xf32>
    %18 = arith.subf %12, %17 : vector<16x256xf32>
    %19 = arith.mulf %18, %18 : vector<16x256xf32>
    %cst_14 = arith.constant dense<0.000000e+00> : vector<256xf32>
    %20 = vector.multi_reduction <add>, %19, %cst_14 [0] : vector<16x256xf32> to vector<256xf32>
    %21 = vector.shape_cast %20 : vector<256xf32> to vector<1x256xf32>
    %cst_15 = arith.constant 1.600000e+01 : f32
    %22 = vector.broadcast %cst_15 : f32 to vector<1x256xf32>
    %23 = arith.divf %21, %22 : vector<1x256xf32>
    %cst_16 = arith.constant 9.99999974E-6 : f32
    %24 = vector.broadcast %cst_16 : f32 to vector<1x256xf32>
    %25 = arith.addf %23, %24 : vector<1x256xf32>
    %26 = math.rsqrt %25 : vector<1x256xf32>
    %27 = vector.broadcast %26 : vector<1x256xf32> to vector<16x256xf32>
    %28 = arith.mulf %18, %27 : vector<16x256xf32>
    %cst_17 = arith.constant 0.000000e+00 : f32
    %29 = vector.broadcast %cst_17 : f32 to vector<16x256xf32>
    %30 = arith.maximumf %28, %29 : vector<16x256xf32>
    %31 = arith.truncf %30 : vector<16x256xf32> to vector<16x256xbf16>
    %c0_18 = arith.constant 0 : index
    %c0_19 = arith.constant 0 : index
    %32 = vector.load %arg5[%c0_18, %c0_19] : memref<256x256xbf16, #tpu.memory_space<vmem>>, vector<256x256xbf16>
    %cst_20 = arith.constant dense<0.000000e+00> : vector<16x256xf32>
    %33 = tpu.matmul %31, %32, %cst_20 {dimension_numbers = #tpu.dot_dimension_numbers<[1], [0], [0], [1], [0, 0, 1, 1], [], []>} : vector<16x256xbf16>, vector<256x256xbf16>, vector<16x256xf32> -> vector<16x256xf32>
    %c0_21 = arith.constant 0 : index
    %c0_22 = arith.constant 0 : index
    %34 = vector.load %arg6[%c0_21, %c0_22] : memref<1x256xf32, #tpu.memory_space<vmem>>, vector<1x256xf32>
    %35 = vector.broadcast %34 : vector<1x256xf32> to vector<16x256xf32>
    %36 = arith.addf %33, %35 : vector<16x256xf32>
    %cst_23 = arith.constant dense<0.000000e+00> : vector<256xf32>
    %37 = vector.multi_reduction <add>, %36, %cst_23 [0] : vector<16x256xf32> to vector<256xf32>
    %38 = vector.shape_cast %37 : vector<256xf32> to vector<1x256xf32>
    %cst_24 = arith.constant 1.600000e+01 : f32
    %39 = vector.broadcast %cst_24 : f32 to vector<1x256xf32>
    %40 = arith.divf %38, %39 : vector<1x256xf32>
    %41 = vector.broadcast %40 : vector<1x256xf32> to vector<16x256xf32>
    %42 = arith.subf %36, %41 : vector<16x256xf32>
    %43 = arith.mulf %42, %42 : vector<16x256xf32>
    %cst_25 = arith.constant dense<0.000000e+00> : vector<256xf32>
    %44 = vector.multi_reduction <add>, %43, %cst_25 [0] : vector<16x256xf32> to vector<256xf32>
    %45 = vector.shape_cast %44 : vector<256xf32> to vector<1x256xf32>
    %cst_26 = arith.constant 1.600000e+01 : f32
    %46 = vector.broadcast %cst_26 : f32 to vector<1x256xf32>
    %47 = arith.divf %45, %46 : vector<1x256xf32>
    %cst_27 = arith.constant 9.99999974E-6 : f32
    %48 = vector.broadcast %cst_27 : f32 to vector<1x256xf32>
    %49 = arith.addf %47, %48 : vector<1x256xf32>
    %50 = math.rsqrt %49 : vector<1x256xf32>
    %51 = vector.broadcast %50 : vector<1x256xf32> to vector<16x256xf32>
    %52 = arith.mulf %42, %51 : vector<16x256xf32>
    %cst_28 = arith.constant 0.000000e+00 : f32
    %53 = vector.broadcast %cst_28 : f32 to vector<16x256xf32>
    %54 = arith.maximumf %52, %53 : vector<16x256xf32>
    %55 = arith.truncf %54 : vector<16x256xf32> to vector<16x256xbf16>
    %c0_29 = arith.constant 0 : index
    %c0_30 = arith.constant 0 : index
    %56 = vector.load %arg7[%c0_29, %c0_30] : memref<256x256xbf16, #tpu.memory_space<vmem>>, vector<256x256xbf16>
    %cst_31 = arith.constant dense<0.000000e+00> : vector<16x256xf32>
    %57 = tpu.matmul %55, %56, %cst_31 {dimension_numbers = #tpu.dot_dimension_numbers<[1], [0], [0], [1], [0, 0, 1, 1], [], []>} : vector<16x256xbf16>, vector<256x256xbf16>, vector<16x256xf32> -> vector<16x256xf32>
    %c0_32 = arith.constant 0 : index
    %c0_33 = arith.constant 0 : index
    %58 = vector.load %arg8[%c0_32, %c0_33] : memref<1x256xf32, #tpu.memory_space<vmem>>, vector<1x256xf32>
    %59 = vector.broadcast %58 : vector<1x256xf32> to vector<16x256xf32>
    %60 = arith.addf %57, %59 : vector<16x256xf32>
    %cst_34 = arith.constant dense<0.000000e+00> : vector<256xf32>
    %61 = vector.multi_reduction <add>, %60, %cst_34 [0] : vector<16x256xf32> to vector<256xf32>
    %62 = vector.shape_cast %61 : vector<256xf32> to vector<1x256xf32>
    %cst_35 = arith.constant 1.600000e+01 : f32
    %63 = vector.broadcast %cst_35 : f32 to vector<1x256xf32>
    %64 = arith.divf %62, %63 : vector<1x256xf32>
    %65 = vector.broadcast %64 : vector<1x256xf32> to vector<16x256xf32>
    %66 = arith.subf %60, %65 : vector<16x256xf32>
    %67 = arith.mulf %66, %66 : vector<16x256xf32>
    %cst_36 = arith.constant dense<0.000000e+00> : vector<256xf32>
    %68 = vector.multi_reduction <add>, %67, %cst_36 [0] : vector<16x256xf32> to vector<256xf32>
    %69 = vector.shape_cast %68 : vector<256xf32> to vector<1x256xf32>
    %cst_37 = arith.constant 1.600000e+01 : f32
    %70 = vector.broadcast %cst_37 : f32 to vector<1x256xf32>
    %71 = arith.divf %69, %70 : vector<1x256xf32>
    %cst_38 = arith.constant 9.99999974E-6 : f32
    %72 = vector.broadcast %cst_38 : f32 to vector<1x256xf32>
    %73 = arith.addf %71, %72 : vector<1x256xf32>
    %74 = math.rsqrt %73 : vector<1x256xf32>
    %75 = vector.broadcast %74 : vector<1x256xf32> to vector<16x256xf32>
    %76 = arith.mulf %66, %75 : vector<16x256xf32>
    %c0_39 = arith.constant 0 : index
    %c0_40 = arith.constant 0 : index
    %77 = vector.load %arg9[%c0_39, %c0_40] : memref<16x256xf32, #tpu.memory_space<vmem>>, vector<16x256xf32>
    tpu.vector_store %arg9[%c0_39, %c0_40], %76 {strides = array<i32>} : memref<16x256xf32, #tpu.memory_space<vmem>>, vector<16x256xf32>,
    return
  }
}

</mosaic_0001>

<llo_original>
// kernel: projection_wrapper_forward.1
$region0: #{projection_wrapper_forward.1}
  #allocation0 [shape = 'u32[]', space=smem, size = 0x4, offset = 0x4, fixed_abs, tag = 'smem constant byte address 0x4 - core index']
  #allocation1 [shape = 'u32[144,128]{1,0:T(1,128)}', space=vmem, size = 0x12000, scoped, tag = 'internal scratch']
  %s0 = inlined_call_operand.vmem [shape: bf16[16,128], index: 0, kind: input, shape index: {}]
  %s1 = inlined_call_operand.vmem [shape: bf16[128,128], index: 1, kind: input, shape index: {}]
  %s2 = inlined_call_operand.vmem [shape: f32[1,128], index: 2, kind: input, shape index: {}]
  %s3 = inlined_call_operand.vmem [shape: bf16[128,256], index: 3, kind: input, shape index: {}]
  %s4 = inlined_call_operand.vmem [shape: f32[1,256], index: 4, kind: input, shape index: {}]
  %s5 = inlined_call_operand.vmem [shape: bf16[256,256], index: 5, kind: input, shape index: {}]
  %s6 = inlined_call_operand.vmem [shape: f32[1,256], index: 6, kind: input, shape index: {}]
  %s7 = inlined_call_operand.vmem [shape: bf16[256,256], index: 7, kind: input, shape index: {}]
  %s8 = inlined_call_operand.vmem [shape: f32[1,256], index: 8, kind: input, shape index: {}]
  %s9 = inlined_call_operand.hbm [shape: f32[16,256], index: 9, kind: output, shape index: {0}]
  %s10 = inlined_call_operand.hbm [shape: f32[16,128], index: 10, kind: output, shape index: {1}]
  %11 = xla_tuple %s9, %s10
  %s12 = sld [smem:[#allocation0]]
  $region54: #{projection_wrapper_forward.1} parent=0
    _
  %s14 = ssub.s32 1, %s12
  %s15 = scalar_select 0, %s14, %s12
  $region1: #{projection_wrapper_forward.1} parent=0
    #allocation2 [shape = 'u8[16384]{0}', space=vmem, size = 0x4000, scoped, tag = 'output window, operand 0, single buffered']
    #allocation3 [shape = 's32[1]{0}', space=sflag, size = 0x4, scoped, tag = 'scoped memory for projection_wrapper_forward.1']
    #allocation4 [shape = 'u8[8192]{0}', space=vmem, size = 0x2000, scoped, tag = 'output window, operand 1, single buffered']
    #allocation5 [shape = 's32[1]{0}', space=sflag, size = 0x4, scoped, tag = 'scoped memory for projection_wrapper_forward.1']
    %16 = vsyncpa [#allocation3], 0
    %17 = vsyncpa [#allocation5], 0
    // Predicated region
    $region2: #{projection_wrapper_forward.1} parent=1 // pred_check
      _
    $region3: #{projection_wrapper_forward.1} parent=1 // pred_check_branch
      %19 = sbr.rel (0) target = $region5
    $region4: #{projection_wrapper_forward.1} parent=1 // pred_region
      _
    $region5: #{projection_wrapper_forward.1} parent=1 // pred_fallthru
      _
    // Predicated region
    $region6: #{projection_wrapper_forward.1} parent=1 // pred_check
      _
    $region7: #{projection_wrapper_forward.1} parent=1 // pred_check_branch
      %21 = sbr.rel (0) target = $region9
    $region8: #{projection_wrapper_forward.1} parent=1 // pred_region
      _
    $region9: #{projection_wrapper_forward.1} parent=1 // pred_fallthru
      _
    // Predicated region
    $region10: #{projection_wrapper_forward.1} parent=1 // pred_check
      _
    $region11: #{projection_wrapper_forward.1} parent=1 // pred_check_branch
      %23 = sbr.rel (0) target = $region13
    $region12: #{projection_wrapper_forward.1} parent=1 // pred_region
      _
    $region13: #{projection_wrapper_forward.1} parent=1 // pred_fallthru
      _
    // Predicated region
    $region14: #{projection_wrapper_forward.1} parent=1 // pred_check
      _
    $region15: #{projection_wrapper_forward.1} parent=1 // pred_check_branch
      %25 = sbr.rel (0) target = $region17
    $region16: #{projection_wrapper_forward.1} parent=1 // pred_region
      _
    $region17: #{projection_wrapper_forward.1} parent=1 // pred_fallthru
      _
    // Predicated region
    $region18: #{projection_wrapper_forward.1} parent=1 // pred_check
      _
    $region19: #{projection_wrapper_forward.1} parent=1 // pred_check_branch
      %27 = sbr.rel (0) target = $region21
    $region20: #{projection_wrapper_forward.1} parent=1 // pred_region
      _
    $region21: #{projection_wrapper_forward.1} parent=1 // pred_fallthru
      _
    // Predicated region
    $region22: #{projection_wrapper_forward.1} parent=1 // pred_check
      _
    $region23: #{projection_wrapper_forward.1} parent=1 // pred_check_branch
      %29 = sbr.rel (0) target = $region25
    $region24: #{projection_wrapper_forward.1} parent=1 // pred_region
      _
    $region25: #{projection_wrapper_forward.1} parent=1 // pred_fallthru
      _
    // Predicated region
    $region26: #{projection_wrapper_forward.1} parent=1 // pred_check
      _
    $region27: #{projection_wrapper_forward.1} parent=1 // pred_check_branch
      %31 = sbr.rel (0) target = $region29
    $region28: #{projection_wrapper_forward.1} parent=1 // pred_region
      _
    $region29: #{projection_wrapper_forward.1} parent=1 // pred_fallthru
      _
    // Predicated region
    $region30: #{projection_wrapper_forward.1} parent=1 // pred_check
      _
    $region31: #{projection_wrapper_forward.1} parent=1 // pred_check_branch
      %33 = sbr.rel (0) target = $region33
    $region32: #{projection_wrapper_forward.1} parent=1 // pred_region
      _
    $region33: #{projection_wrapper_forward.1} parent=1 // pred_fallthru
      _
    // Predicated region
    $region34: #{projection_wrapper_forward.1} parent=1 // pred_check
      _
    $region35: #{projection_wrapper_forward.1} parent=1 // pred_check_branch
      %35 = sbr.rel (0) target = $region37
    $region36: #{projection_wrapper_forward.1} parent=1 // pred_region
      _
    $region37: #{projection_wrapper_forward.1} parent=1 // pred_fallthru
      _
    %v37 = vld [vmem:[%s0] sm:$0xf]
    %v38 = vld [vmem:[%s0 + $0x4] sm:$0xf]
    %v39 = vld [vmem:[%s1] sm:$0xf]
    %v40 = vld [vmem:[%s1 + $0x4] sm:$0xf]
    %v41 = vld [vmem:[%s1 + $0x8] sm:$0xf]
    %v42 = vld [vmem:[%s1 + $0xc] sm:$0xf]
    %v43 = vld [vmem:[%s1 + $0x10] sm:$0xf]
    %v44 = vld [vmem:[%s1 + $0x14] sm:$0xf]
    %v45 = vld [vmem:[%s1 + $0x18] sm:$0xf]
    %v46 = vld [vmem:[%s1 + $0x1c] sm:$0xf]
    %v47 = vld [vmem:[%s1 + $0x20] sm:$0xf]
    %v48 = vld [vmem:[%s1 + $0x24] sm:$0xf]
    %v49 = vld [vmem:[%s1 + $0x28] sm:$0xf]
    %v50 = vld [vmem:[%s1 + $0x2c] sm:$0xf]
    %v51 = vld [vmem:[%s1 + $0x30] sm:$0xf]
    %v52 = vld [vmem:[%s1 + $0x34] sm:$0xf]
    %v53 = vld [vmem:[%s1 + $0x38] sm:$0xf]
    %v54 = vld [vmem:[%s1 + $0x3c] sm:$0xf]
    %v55 = vld [vmem:[%s2] sm:$0x1]
    %v57 = vlaneseq
    %v58 = vshrl.u32 %v57, 7
    %v59 = vsub.s32 0, %v58
    %v60 = vrot.slane %v55, %v59
    %v64 = vunpack.c.l.b16 %v37
    %v65 = vunpack.c.l.b16 %v38
    %v66 = vpack.c.b16 %v65, %v64
    %v84 = vunpack.c.l.b16 %v39
    %v85 = vunpack.c.l.b16 %v40
    %v86 = vunpack.c.l.b16 %v41
    %v87 = vunpack.c.l.b16 %v42
    %v88 = vunpack.c.l.b16 %v43
    %v89 = vunpack.c.l.b16 %v44
    %v90 = vunpack.c.l.b16 %v45
    %v91 = vunpack.c.l.b16 %v46
    %v92 = vunpack.c.l.b16 %v47
    %v93 = vunpack.c.l.b16 %v48
    %v94 = vunpack.c.l.b16 %v49
    %v95 = vunpack.c.l.b16 %v50
    %v96 = vunpack.c.l.b16 %v51
    %v97 = vunpack.c.l.b16 %v52
    %v98 = vunpack.c.l.b16 %v53
    %v99 = vunpack.c.l.b16 %v54
    %v100 = vpack.c.b16 %v85, %v84
    %v101 = vpack.c.b16 %v87, %v86
    %v102 = vpack.c.b16 %v89, %v88
    %v103 = vpack.c.b16 %v91, %v90
    %v104 = vpack.c.b16 %v93, %v92
    %v105 = vpack.c.b16 %v95, %v94
    %v106 = vpack.c.b16 %v97, %v96
    %v107 = vpack.c.b16 %v99, %v98
    %116 = vmatprep.subr.bf16.mxu0 0
    %117 = vmatpush1.bf16.msra.mxu0 %v100
    %118 = vmatprep.subr.bf16.mxu0 0
    %119 = vmatpush1.bf16.msra.mxu0 %v101
    %120 = vmatprep.subr.bf16.mxu0 0
    %121 = vmatpush1.bf16.msra.mxu0 %v102
    %122 = vmatprep.subr.bf16.mxu0 0
    %123 = vmatpush1.bf16.msra.mxu0 %v103
    %124 = vmatprep.subr.bf16.mxu0 0
    %125 = vmatpush1.bf16.msra.mxu0 %v104
    %126 = vmatprep.subr.bf16.mxu0 0
    %127 = vmatpush1.bf16.msra.mxu0 %v105
    %128 = vmatprep.subr.bf16.mxu0 0
    %129 = vmatpush1.bf16.msra.mxu0 %v106
    %130 = vmatprep.subr.bf16.mxu0 0
    %131 = vmatpush1.bf16.msra.mxu0 %v107
    %132 = vmatprep.subr.bf16.mxu0 0
    %133 = vmatpush1.bf16.msra.mxu0 0
    %134 = vmatprep.subr.bf16.mxu0 0
    %135 = vmatpush1.bf16.msra.mxu0 0
    %136 = vmatprep.subr.bf16.mxu0 0
    %137 = vmatpush1.bf16.msra.mxu0 0
    %138 = vmatprep.subr.bf16.mxu0 0
    %139 = vmatpush1.bf16.msra.mxu0 0
    %140 = vmatprep.subr.bf16.mxu0 0
    %141 = vmatpush1.bf16.msra.mxu0 0
    %142 = vmatprep.subr.bf16.mxu0 0
    %143 = vmatpush1.bf16.msra.mxu0 0
    %144 = vmatprep.subr.bf16.mxu0 0
    %145 = vmatpush1.bf16.msra.mxu0 0
    %146 = vmatprep.subr.bf16.mxu0 0
    %147 = vmatpush1.bf16.msra.mxu0 0
    %148 = vmatprep.mubr.bf16.mxu0 0
    %149 = vmatmul.mubr.bf16.gmra.mrb[0].mxu0 %v66
    %v150 = vpop.f32.mrb[0].mxu0
    %v151 = vadd.f32 %v60, %v150
    %v152 = vpop.f32.mrb[0].mxu0
    %v153 = vpop.f32.mrb[0].mxu0
    %v154 = vadd.f32 %v60, %v153
    %v155 = vpop.f32.mrb[0].mxu0
    %156 = vdwg.mxu0
    %157 = vst [vmem:[#allocation4] sm:$0xff] %v151
    %158 = vst [vmem:[#allocation4 + $0x8] sm:$0xff] %v154
    %v159 = vpack.c.bf16 %v154, %v151
    %v160 = vld [vmem:[%s3] sm:$0xff]
    %v161 = vld [vmem:[%s3 + $0x8] sm:$0xff]
    %v162 = vld [vmem:[%s3 + $0x10] sm:$0xff]
    %v163 = vld [vmem:[%s3 + $0x18] sm:$0xff]
    %v164 = vld [vmem:[%s3 + $0x20] sm:$0xff]
    %v165 = vld [vmem:[%s3 + $0x28] sm:$0xff]
    %v166 = vld [vmem:[%s3 + $0x30] sm:$0xff]
    %v167 = vld [vmem:[%s3 + $0x38] sm:$0xff]
    %v168 = vld [vmem:[%s3 + $0x40] sm:$0xff]
    %v169 = vld [vmem:[%s3 + $0x48] sm:$0xff]
    %v170 = vld [vmem:[%s3 + $0x50] sm:$0xff]
    %v171 = vld [vmem:[%s3 + $0x58] sm:$0xff]
    %v172 = vld [vmem:[%s3 + $0x60] sm:$0xff]
    %v173 = vld [vmem:[%s3 + $0x68] sm:$0xff]
    %v174 = vld [vmem:[%s3 + $0x70] sm:$0xff]
    %v175 = vld [vmem:[%s3 + $0x78] sm:$0xff]
    %v176 = vld [vmem:[%s4] sm:$0x3]
    %v178 = vlaneseq
    %v179 = vshrl.u32 %v178, 7
    %v180 = vsub.s32 0, %v179
    %v181 = vrot.slane %v176, %v180
    %v182 = vlaneseq
    %v183 = vshrl.u32 %v182, 7
    %v184 = vsub.s32 1, %v183
    %v185 = vrot.slane %v176, %v184
    %v204 = vunpack.c.l.b16 %v160
    %v205 = vunpack.c.h.b16 %v160
    %v206 = vunpack.c.l.b16 %v161
    %v207 = vunpack.c.h.b16 %v161
    %v208 = vunpack.c.l.b16 %v162
    %v209 = vunpack.c.h.b16 %v162
    %v210 = vunpack.c.l.b16 %v163
    %v211 = vunpack.c.h.b16 %v163
    %v212 = vunpack.c.l.b16 %v164
    %v213 = vunpack.c.h.b16 %v164
    %v214 = vunpack.c.l.b16 %v165
    %v215 = vunpack.c.h.b16 %v165
    %v216 = vunpack.c.l.b16 %v166
    %v217 = vunpack.c.h.b16 %v166
    %v218 = vunpack.c.l.b16 %v167
    %v219 = vunpack.c.h.b16 %v167
    %v220 = vunpack.c.l.b16 %v168
    %v221 = vunpack.c.h.b16 %v168
    %v222 = vunpack.c.l.b16 %v169
    %v223 = vunpack.c.h.b16 %v169
    %v224 = vunpack.c.l.b16 %v170
    %v225 = vunpack.c.h.b16 %v170
    %v226 = vunpack.c.l.b16 %v171
    %v227 = vunpack.c.h.b16 %v171
    %v228 = vunpack.c.l.b16 %v172
    %v229 = vunpack.c.h.b16 %v172
    %v230 = vunpack.c.l.b16 %v173
    %v231 = vunpack.c.h.b16 %v173
    %v232 = vunpack.c.l.b16 %v174
    %v233 = vunpack.c.h.b16 %v174
    %v234 = vunpack.c.l.b16 %v175
    %v235 = vunpack.c.h.b16 %v175
    %v236 = vpack.c.b16 %v206, %v204
    %v237 = vpack.c.b16 %v207, %v205
    %v238 = vpack.c.b16 %v210, %v208
    %v239 = vpack.c.b16 %v211, %v209
    %v240 = vpack.c.b16 %v214, %v212
    %v241 = vpack.c.b16 %v215, %v213
    %v242 = vpack.c.b16 %v218, %v216
    %v243 = vpack.c.b16 %v219, %v217
    %v244 = vpack.c.b16 %v222, %v220
    %v245 = vpack.c.b16 %v223, %v221
    %v246 = vpack.c.b16 %v226, %v224
    %v247 = vpack.c.b16 %v227, %v225
    %v248 = vpack.c.b16 %v230, %v228
    %v249 = vpack.c.b16 %v231, %v229
    %v250 = vpack.c.b16 %v234, %v232
    %v251 = vpack.c.b16 %v235, %v233
    %268 = vmatprep.subr.bf16.mxu0 %v237
    %269 = vmatpush1.bf16.msra.mxu0 %v236
    %270 = vmatprep.subr.bf16.mxu0 %v239
    %271 = vmatpush1.bf16.msra.mxu0 %v238
    %272 = vmatprep.subr.bf16.mxu0 %v241
    %273 = vmatpush1.bf16.msra.mxu0 %v240
    %274 = vmatprep.subr.bf16.mxu0 %v243
    %275 = vmatpush1.bf16.msra.mxu0 %v242
    %276 = vmatprep.subr.bf16.mxu0 %v245
    %277 = vmatpush1.bf16.msra.mxu0 %v244
    %278 = vmatprep.subr.bf16.mxu0 %v247
    %279 = vmatpush1.bf16.msra.mxu0 %v246
    %280 = vmatprep.subr.bf16.mxu0 %v249
    %281 = vmatpush1.bf16.msra.mxu0 %v248
    %282 = vmatprep.subr.bf16.mxu0 %v251
    %283 = vmatpush1.bf16.msra.mxu0 %v250
    %284 = vmatprep.subr.bf16.mxu0 0
    %285 = vmatpush1.bf16.msra.mxu0 0
    %286 = vmatprep.subr.bf16.mxu0 0
    %287 = vmatpush1.bf16.msra.mxu0 0
    %288 = vmatprep.subr.bf16.mxu0 0
    %289 = vmatpush1.bf16.msra.mxu0 0
    %290 = vmatprep.subr.bf16.mxu0 0
    %291 = vmatpush1.bf16.msra.mxu0 0
    %292 = vmatprep.subr.bf16.mxu0 0
    %293 = vmatpush1.bf16.msra.mxu0 0
    %294 = vmatprep.subr.bf16.mxu0 0
    %295 = vmatpush1.bf16.msra.mxu0 0
    %296 = vmatprep.subr.bf16.mxu0 0
    %297 = vmatpush1.bf16.msra.mxu0 0
    %298 = vmatprep.subr.bf16.mxu0 0
    %299 = vmatpush1.bf16.msra.mxu0 0
    %300 = vmatprep.mubr.bf16.mxu0 0
    %301 = vmatmul.mubr.bf16.gmra.mrb[0].mxu0 %v159
    %v302 = vpop.f32.mrb[0].mxu0
    %v303 = vadd.f32 %v181, %v302
    %v304 = vpop.f32.mrb[0].mxu0
    %v305 = vadd.f32 %v185, %v304
    %v306 = vpop.f32.mrb[0].mxu0
    %v307 = vadd.f32 %v181, %v306
    %v308 = vpop.f32.mrb[0].mxu0
    %v309 = vadd.f32 %v185, %v308
    %310 = vdwg.mxu0
    %v311 = vadd.f32 %v303, %v307
    %v312 = vrot.slane %v311, 4
    %v313 = vadd.f32 %v311, %v312
    %v314 = vrot.slane %v313, 2
    %v315 = vadd.f32 %v313, %v314
    %v316 = vrot.slane %v315, 1
    %v317 = vadd.f32 %v315, %v316
    %v318 = vadd.f32 %v305, %v309
    %v319 = vrot.slane %v318, 4
    %v320 = vadd.f32 %v318, %v319
    %v321 = vrot.slane %v320, 2
    %v322 = vadd.f32 %v320, %v321
    %v323 = vrot.slane %v322, 1
    %v324 = vadd.f32 %v322, %v323
    %v325 = vrcp.pop 16.0
    %v326 = vmul.f32 %v317, %v325
    %v327 = vmul.f32 %v324, %v325
    %v328 = vsub.f32 %v303, %v326
    %v329 = vsub.f32 %v305, %v327
    %v330 = vsub.f32 %v307, %v326
    %v331 = vsub.f32 %v309, %v327
    %v332 = vmul.f32 %v328, %v328
    %v333 = vmul.f32 %v329, %v329
    %v334 = vmul.f32 %v330, %v330
    %v335 = vmul.f32 %v331, %v331
    %v336 = vadd.f32 %v332, %v334
    %v337 = vrot.slane %v336, 4
    %v338 = vadd.f32 %v336, %v337
    %v339 = vrot.slane %v338, 2
    %v340 = vadd.f32 %v338, %v339
    %v341 = vrot.slane %v340, 1
    %v342 = vadd.f32 %v340, %v341
    %v343 = vadd.f32 %v333, %v335
    %v344 = vrot.slane %v343, 4
    %v345 = vadd.f32 %v343, %v344
    %v346 = vrot.slane %v345, 2
    %v347 = vadd.f32 %v345, %v346
    %v348 = vrot.slane %v347, 1
    %v349 = vadd.f32 %v347, %v348
    %v350 = vmul.f32 %v342, %v325
    %v351 = vmul.f32 %v349, %v325
    %v352 = vadd.f32 %v350, 1e-05
    %v353 = vadd.f32 %v351, 1e-05
    %v354 = vrsqrt.pop %v352
    %v355 = vrsqrt.pop %v353
    %v356 = vmul.f32 %v328, %v354
    %v357 = vmul.f32 %v329, %v355
    %v358 = vmul.f32 %v330, %v354
    %v359 = vmul.f32 %v331, %v355
    %v360 = vmax.f32 %v356, 0.0
    %v361 = vmax.f32 %v357, 0.0
    %v362 = vmax.f32 %v358, 0.0
    %v363 = vmax.f32 %v359, 0.0
    %v364 = vpack.c.bf16 %v362, %v360
    %v365 = vpack.c.bf16 %v363, %v361
    %v366 = vld [vmem:[%s5] sm:$0xff]
    %v367 = vld [vmem:[%s5 + $0x8] sm:$0xff]
    %v368 = vld [vmem:[%s5 + $0x10] sm:$0xff]
    %v369 = vld [vmem:[%s5 + $0x18] sm:$0xff]
    %v370 = vld [vmem:[%s5 + $0x20] sm:$0xff]
    %v371 = vld [vmem:[%s5 + $0x28] sm:$0xff]
    %v372 = vld [vmem:[%s5 + $0x30] sm:$0xff]
    %v373 = vld [vmem:[%s5 + $0x38] sm:$0xff]
    %v374 = vld [vmem:[%s5 + $0x40] sm:$0xff]
    %v375 = vld [vmem:[%s5 + $0x48] sm:$0xff]
    %v376 = vld [vmem:[%s5 + $0x50] sm:$0xff]
    %v377 = vld [vmem:[%s5 + $0x58] sm:$0xff]
    %v378 = vld [vmem:[%s5 + $0x60] sm:$0xff]
    %v379 = vld [vmem:[%s5 + $0x68] sm:$0xff]
    %v380 = vld [vmem:[%s5 + $0x70] sm:$0xff]
    %v381 = vld [vmem:[%s5 + $0x78] sm:$0xff]
    %v382 = vld [vmem:[%s5 + $0x80] sm:$0xff]
    %v383 = vld [vmem:[%s5 + $0x88] sm:$0xff]
    %v384 = vld [vmem:[%s5 + $0x90] sm:$0xff]
    %v385 = vld [vmem:[%s5 + $0x98] sm:$0xff]
    %v386 = vld [vmem:[%s5 + $0xa0] sm:$0xff]
    %v387 = vld [vmem:[%s5 + $0xa8] sm:$0xff]
    %v388 = vld [vmem:[%s5 + $0xb0] sm:$0xff]
    %v389 = vld [vmem:[%s5 + $0xb8] sm:$0xff]
    %v390 = vld [vmem:[%s5 + $0xc0] sm:$0xff]
    %v391 = vld [vmem:[%s5 + $0xc8] sm:$0xff]
    %v392 = vld [vmem:[%s5 + $0xd0] sm:$0xff]
    %v393 = vld [vmem:[%s5 + $0xd8] sm:$0xff]
    %v394 = vld [vmem:[%s5 + $0xe0] sm:$0xff]
    %v395 = vld [vmem:[%s5 + $0xe8] sm:$0xff]
    %v396 = vld [vmem:[%s5 + $0xf0] sm:$0xff]
    %v397 = vld [vmem:[%s5 + $0xf8] sm:$0xff]
    %v398 = vld [vmem:[%s6] sm:$0x3]
    %v400 = vlaneseq
    %v401 = vshrl.u32 %v400, 7
    %v402 = vsub.s32 0, %v401
    %v403 = vrot.slane %v398, %v402
    %v404 = vlaneseq
    %v405 = vshrl.u32 %v404, 7
    %v406 = vsub.s32 1, %v405
    %v407 = vrot.slane %v398, %v406
    %v442 = vunpack.c.l.b16 %v366
    %v443 = vunpack.c.h.b16 %v366
    %v444 = vunpack.c.l.b16 %v367
    %v445 = vunpack.c.h.b16 %v367
    %v446 = vunpack.c.l.b16 %v368
    %v447 = vunpack.c.h.b16 %v368
    %v448 = vunpack.c.l.b16 %v369
    %v449 = vunpack.c.h.b16 %v369
    %v450 = vunpack.c.l.b16 %v370
    %v451 = vunpack.c.h.b16 %v370
    %v452 = vunpack.c.l.b16 %v371
    %v453 = vunpack.c.h.b16 %v371
    %v454 = vunpack.c.l.b16 %v372
    %v455 = vunpack.c.h.b16 %v372
    %v456 = vunpack.c.l.b16 %v373
    %v457 = vunpack.c.h.b16 %v373
    %v458 = vunpack.c.l.b16 %v374
    %v459 = vunpack.c.h.b16 %v374
    %v460 = vunpack.c.l.b16 %v375
    %v461 = vunpack.c.h.b16 %v375
    %v462 = vunpack.c.l.b16 %v376
    %v463 = vunpack.c.h.b16 %v376
    %v464 = vunpack.c.l.b16 %v377
    %v465 = vunpack.c.h.b16 %v377
    %v466 = vunpack.c.l.b16 %v378
    %v467 = vunpack.c.h.b16 %v378
    %v468 = vunpack.c.l.b16 %v379
    %v469 = vunpack.c.h.b16 %v379
    %v470 = vunpack.c.l.b16 %v380
    %v471 = vunpack.c.h.b16 %v380
    %v472 = vunpack.c.l.b16 %v381
    %v473 = vunpack.c.h.b16 %v381
    %v474 = vunpack.c.l.b16 %v382
    %v475 = vunpack.c.h.b16 %v382
    %v476 = vunpack.c.l.b16 %v383
    %v477 = vunpack.c.h.b16 %v383
    %v478 = vunpack.c.l.b16 %v384
    %v479 = vunpack.c.h.b16 %v384
    %v480 = vunpack.c.l.b16 %v385
    %v481 = vunpack.c.h.b16 %v385
    %v482 = vunpack.c.l.b16 %v386
    %v483 = vunpack.c.h.b16 %v386
    %v484 = vunpack.c.l.b16 %v387
    %v485 = vunpack.c.h.b16 %v387
    %v486 = vunpack.c.l.b16 %v388
    %v487 = vunpack.c.h.b16 %v388
    %v488 = vunpack.c.l.b16 %v389
    %v489 = vunpack.c.h.b16 %v389
    %v490 = vunpack.c.l.b16 %v390
    %v491 = vunpack.c.h.b16 %v390
    %v492 = vunpack.c.l.b16 %v391
    %v493 = vunpack.c.h.b16 %v391
    %v494 = vunpack.c.l.b16 %v392
    %v495 = vunpack.c.h.b16 %v392
    %v496 = vunpack.c.l.b16 %v393
    %v497 = vunpack.c.h.b16 %v393
    %v498 = vunpack.c.l.b16 %v394
    %v499 = vunpack.c.h.b16 %v394
    %v500 = vunpack.c.l.b16 %v395
    %v501 = vunpack.c.h.b16 %v395
    %v502 = vunpack.c.l.b16 %v396
    %v503 = vunpack.c.h.b16 %v396
    %v504 = vunpack.c.l.b16 %v397
    %v505 = vunpack.c.h.b16 %v397
    %v506 = vpack.c.b16 %v444, %v442
    %v507 = vpack.c.b16 %v445, %v443
    %v508 = vpack.c.b16 %v448, %v446
    %v509 = vpack.c.b16 %v449, %v447
    %v510 = vpack.c.b16 %v452, %v450
    %v511 = vpack.c.b16 %v453, %v451
    %v512 = vpack.c.b16 %v456, %v454
    %v513 = vpack.c.b16 %v457, %v455
    %v514 = vpack.c.b16 %v460, %v458
    %v515 = vpack.c.b16 %v461, %v459
    %v516 = vpack.c.b16 %v464, %v462
    %v517 = vpack.c.b16 %v465, %v463
    %v518 = vpack.c.b16 %v468, %v466
    %v519 = vpack.c.b16 %v469, %v467
    %v520 = vpack.c.b16 %v472, %v470
    %v521 = vpack.c.b16 %v473, %v471
    %v522 = vpack.c.b16 %v476, %v474
    %v523 = vpack.c.b16 %v477, %v475
    %v524 = vpack.c.b16 %v480, %v478
    %v525 = vpack.c.b16 %v481, %v479
    %v526 = vpack.c.b16 %v484, %v482
    %v527 = vpack.c.b16 %v485, %v483
    %v528 = vpack.c.b16 %v488, %v486
    %v529 = vpack.c.b16 %v489, %v487
    %v530 = vpack.c.b16 %v492, %v490
    %v531 = vpack.c.b16 %v493, %v491
    %v532 = vpack.c.b16 %v496, %v494
    %v533 = vpack.c.b16 %v497, %v495
    %v534 = vpack.c.b16 %v500, %v498
    %v535 = vpack.c.b16 %v501, %v499
    %v536 = vpack.c.b16 %v504, %v502
    %v537 = vpack.c.b16 %v505, %v503
    %570 = vmatprep.subr.bf16.mxu0 %v507
    %571 = vmatpush1.bf16.msra.mxu0 %v506
    %572 = vmatprep.subr.bf16.mxu0 %v509
    %573 = vmatpush1.bf16.msra.mxu0 %v508
    %574 = vmatprep.subr.bf16.mxu0 %v511
    %575 = vmatpush1.bf16.msra.mxu0 %v510
    %576 = vmatprep.subr.bf16.mxu0 %v513
    %577 = vmatpush1.bf16.msra.mxu0 %v512
    %578 = vmatprep.subr.bf16.mxu0 %v515
    %579 = vmatpush1.bf16.msra.mxu0 %v514
    %580 = vmatprep.subr.bf16.mxu0 %v517
    %581 = vmatpush1.bf16.msra.mxu0 %v516
    %582 = vmatprep.subr.bf16.mxu0 %v519
    %583 = vmatpush1.bf16.msra.mxu0 %v518
    %584 = vmatprep.subr.bf16.mxu0 %v521
    %585 = vmatpush1.bf16.msra.mxu0 %v520
    %586 = vmatprep.subr.bf16.mxu0 %v523
    %587 = vmatpush1.bf16.msra.mxu0 %v522
    %588 = vmatprep.subr.bf16.mxu0 %v525
    %589 = vmatpush1.bf16.msra.mxu0 %v524
    %590 = vmatprep.subr.bf16.mxu0 %v527
    %591 = vmatpush1.bf16.msra.mxu0 %v526
    %592 = vmatprep.subr.bf16.mxu0 %v529
    %593 = vmatpush1.bf16.msra.mxu0 %v528
    %594 = vmatprep.subr.bf16.mxu0 %v531
    %595 = vmatpush1.bf16.msra.mxu0 %v530
    %596 = vmatprep.subr.bf16.mxu0 %v533
    %597 = vmatpush1.bf16.msra.mxu0 %v532
    %598 = vmatprep.subr.bf16.mxu0 %v535
    %599 = vmatpush1.bf16.msra.mxu0 %v534
    %600 = vmatprep.subr.bf16.mxu0 %v537
    %601 = vmatpush1.bf16.msra.mxu0 %v536
    %602 = vmatprep.mubr.bf16.mxu0 %v365
    %603 = vmatmul.mubr.bf16.gmra.mrb[0].mxu0 %v364
    %v604 = vpop.f32.mrb[0].mxu0
    %v605 = vadd.f32 %v403, %v604
    %v606 = vpop.f32.mrb[0].mxu0
    %v607 = vadd.f32 %v407, %v606
    %v608 = vpop.f32.mrb[0].mxu0
    %v609 = vadd.f32 %v403, %v608
    %v610 = vpop.f32.mrb[0].mxu0
    %v611 = vadd.f32 %v407, %v610
    %612 = vdwg.mxu0
    %v613 = vadd.f32 %v605, %v609
    %v614 = vrot.slane %v613, 4
    %v615 = vadd.f32 %v613, %v614
    %v616 = vrot.slane %v615, 2
    %v617 = vadd.f32 %v615, %v616
    %v618 = vrot.slane %v617, 1
    %v619 = vadd.f32 %v617, %v618
    %v620 = vadd.f32 %v607, %v611
    %v621 = vrot.slane %v620, 4
    %v622 = vadd.f32 %v620, %v621
    %v623 = vrot.slane %v622, 2
    %v624 = vadd.f32 %v622, %v623
    %v625 = vrot.slane %v624, 1
    %v626 = vadd.f32 %v624, %v625
    %v627 = vmul.f32 %v619, %v325
    %v628 = vmul.f32 %v626, %v325
    %v629 = vsub.f32 %v605, %v627
    %v630 = vsub.f32 %v607, %v628
    %v631 = vsub.f32 %v609, %v627
    %v632 = vsub.f32 %v611, %v628
    %v633 = vmul.f32 %v629, %v629
    %v634 = vmul.f32 %v630, %v630
    %v635 = vmul.f32 %v631, %v631
    %v636 = vmul.f32 %v632, %v632
    %v637 = vadd.f32 %v633, %v635
    %v638 = vrot.slane %v637, 4
    %v639 = vadd.f32 %v637, %v638
    %v640 = vrot.slane %v639, 2
    %v641 = vadd.f32 %v639, %v640
    %v642 = vrot.slane %v641, 1
    %v643 = vadd.f32 %v641, %v642
    %v644 = vadd.f32 %v634, %v636
    %v645 = vrot.slane %v644, 4
    %v646 = vadd.f32 %v644, %v645
    %v647 = vrot.slane %v646, 2
    %v648 = vadd.f32 %v646, %v647
    %v649 = vrot.slane %v648, 1
    %v650 = vadd.f32 %v648, %v649
    %v651 = vmul.f32 %v643, %v325
    %v652 = vmul.f32 %v650, %v325
    %v653 = vadd.f32 %v651, 1e-05
    %v654 = vadd.f32 %v652, 1e-05
    %v655 = vrsqrt.pop %v653
    %v656 = vrsqrt.pop %v654
    %v657 = vmul.f32 %v629, %v655
    %v658 = vmul.f32 %v630, %v656
    %v659 = vmul.f32 %v631, %v655
    %v660 = vmul.f32 %v632, %v656
    %v661 = vmax.f32 %v657, 0.0
    %v662 = vmax.f32 %v658, 0.0
    %v663 = vmax.f32 %v659, 0.0
    %v664 = vmax.f32 %v660, 0.0
    %v665 = vpack.c.bf16 %v663, %v661
    %v666 = vpack.c.bf16 %v664, %v662
    %v667 = vld [vmem:[%s7] sm:$0xff]
    %v668 = vld [vmem:[%s7 + $0x8] sm:$0xff]
    %v669 = vld [vmem:[%s7 + $0x10] sm:$0xff]
    %v670 = vld [vmem:[%s7 + $0x18] sm:$0xff]
    %v671 = vld [vmem:[%s7 + $0x20] sm:$0xff]
    %v672 = vld [vmem:[%s7 + $0x28] sm:$0xff]
    %v673 = vld [vmem:[%s7 + $0x30] sm:$0xff]
    %v674 = vld [vmem:[%s7 + $0x38] sm:$0xff]
    %v675 = vld [vmem:[%s7 + $0x40] sm:$0xff]
    %v676 = vld [vmem:[%s7 + $0x48] sm:$0xff]
    %v677 = vld [vmem:[%s7 + $0x50] sm:$0xff]
    %v678 = vld [vmem:[%s7 + $0x58] sm:$0xff]
    %v679 = vld [vmem:[%s7 + $0x60] sm:$0xff]
    %v680 = vld [vmem:[%s7 + $0x68] sm:$0xff]
    %v681 = vld [vmem:[%s7 + $0x70] sm:$0xff]
    %v682 = vld [vmem:[%s7 + $0x78] sm:$0xff]
    %v683 = vld [vmem:[%s7 + $0x80] sm:$0xff]
    %v684 = vld [vmem:[%s7 + $0x88] sm:$0xff]
    %v685 = vld [vmem:[%s7 + $0x90] sm:$0xff]
    %v686 = vld [vmem:[%s7 + $0x98] sm:$0xff]
    %v687 = vld [vmem:[%s7 + $0xa0] sm:$0xff]
    %v688 = vld [vmem:[%s7 + $0xa8] sm:$0xff]
    %v689 = vld [vmem:[%s7 + $0xb0] sm:$0xff]
    %v690 = vld [vmem:[%s7 + $0xb8] sm:$0xff]
    %v691 = vld [vmem:[%s7 + $0xc0] sm:$0xff]
    %v692 = vld [vmem:[%s7 + $0xc8] sm:$0xff]
    %v693 = vld [vmem:[%s7 + $0xd0] sm:$0xff]
    %v694 = vld [vmem:[%s7 + $0xd8] sm:$0xff]
    %v695 = vld [vmem:[%s7 + $0xe0] sm:$0xff]
    %v696 = vld [vmem:[%s7 + $0xe8] sm:$0xff]
    %v697 = vld [vmem:[%s7 + $0xf0] sm:$0xff]
    %v698 = vld [vmem:[%s7 + $0xf8] sm:$0xff]
    %v699 = vld [vmem:[%s8] sm:$0x3]
    %v701 = vlaneseq
    %v702 = vshrl.u32 %v701, 7
    %v703 = vsub.s32 0, %v702
    %v704 = vrot.slane %v699, %v703
    %v705 = vlaneseq
    %v706 = vshrl.u32 %v705, 7
    %v707 = vsub.s32 1, %v706
    %v708 = vrot.slane %v699, %v707
    %v743 = vunpack.c.l.b16 %v667
    %v744 = vunpack.c.h.b16 %v667
    %v745 = vunpack.c.l.b16 %v668
    %v746 = vunpack.c.h.b16 %v668
    %v747 = vunpack.c.l.b16 %v669
    %v748 = vunpack.c.h.b16 %v669
    %v749 = vunpack.c.l.b16 %v670
    %v750 = vunpack.c.h.b16 %v670
    %v751 = vunpack.c.l.b16 %v671
    %v752 = vunpack.c.h.b16 %v671
    %v753 = vunpack.c.l.b16 %v672
    %v754 = vunpack.c.h.b16 %v672
    %v755 = vunpack.c.l.b16 %v673
    %v756 = vunpack.c.h.b16 %v673
    %v757 = vunpack.c.l.b16 %v674
    %v758 = vunpack.c.h.b16 %v674
    %v759 = vunpack.c.l.b16 %v675
    %v760 = vunpack.c.h.b16 %v675
    %v761 = vunpack.c.l.b16 %v676
    %v762 = vunpack.c.h.b16 %v676
    %v763 = vunpack.c.l.b16 %v677
    %v764 = vunpack.c.h.b16 %v677
    %v765 = vunpack.c.l.b16 %v678
    %v766 = vunpack.c.h.b16 %v678
    %v767 = vunpack.c.l.b16 %v679
    %v768 = vunpack.c.h.b16 %v679
    %v769 = vunpack.c.l.b16 %v680
    %v770 = vunpack.c.h.b16 %v680
    %v771 = vunpack.c.l.b16 %v681
    %v772 = vunpack.c.h.b16 %v681
    %v773 = vunpack.c.l.b16 %v682
    %v774 = vunpack.c.h.b16 %v682
    %v775 = vunpack.c.l.b16 %v683
    %v776 = vunpack.c.h.b16 %v683
    %v777 = vunpack.c.l.b16 %v684
    %v778 = vunpack.c.h.b16 %v684
    %v779 = vunpack.c.l.b16 %v685
    %v780 = vunpack.c.h.b16 %v685
    %v781 = vunpack.c.l.b16 %v686
    %v782 = vunpack.c.h.b16 %v686
    %v783 = vunpack.c.l.b16 %v687
    %v784 = vunpack.c.h.b16 %v687
    %v785 = vunpack.c.l.b16 %v688
    %v786 = vunpack.c.h.b16 %v688
    %v787 = vunpack.c.l.b16 %v689
    %v788 = vunpack.c.h.b16 %v689
    %v789 = vunpack.c.l.b16 %v690
    %v790 = vunpack.c.h.b16 %v690
    %v791 = vunpack.c.l.b16 %v691
    %v792 = vunpack.c.h.b16 %v691
    %v793 = vunpack.c.l.b16 %v692
    %v794 = vunpack.c.h.b16 %v692
    %v795 = vunpack.c.l.b16 %v693
    %v796 = vunpack.c.h.b16 %v693
    %v797 = vunpack.c.l.b16 %v694
    %v798 = vunpack.c.h.b16 %v694
    %v799 = vunpack.c.l.b16 %v695
    %v800 = vunpack.c.h.b16 %v695
    %v801 = vunpack.c.l.b16 %v696
    %v802 = vunpack.c.h.b16 %v696
    %v803 = vunpack.c.l.b16 %v697
    %v804 = vunpack.c.h.b16 %v697
    %v805 = vunpack.c.l.b16 %v698
    %v806 = vunpack.c.h.b16 %v698
    %v807 = vpack.c.b16 %v745, %v743
    %v808 = vpack.c.b16 %v746, %v744
    %v809 = vpack.c.b16 %v749, %v747
    %v810 = vpack.c.b16 %v750, %v748
    %v811 = vpack.c.b16 %v753, %v751
    %v812 = vpack.c.b16 %v754, %v752
    %v813 = vpack.c.b16 %v757, %v755
    %v814 = vpack.c.b16 %v758, %v756
    %v815 = vpack.c.b16 %v761, %v759
    %v816 = vpack.c.b16 %v762, %v760
    %v817 = vpack.c.b16 %v765, %v763
    %v818 = vpack.c.b16 %v766, %v764
    %v819 = vpack.c.b16 %v769, %v767
    %v820 = vpack.c.b16 %v770, %v768
    %v821 = vpack.c.b16 %v773, %v771
    %v822 = vpack.c.b16 %v774, %v772
    %v823 = vpack.c.b16 %v777, %v775
    %v824 = vpack.c.b16 %v778, %v776
    %v825 = vpack.c.b16 %v781, %v779
    %v826 = vpack.c.b16 %v782, %v780
    %v827 = vpack.c.b16 %v785, %v783
    %v828 = vpack.c.b16 %v786, %v784
    %v829 = vpack.c.b16 %v789, %v787
    %v830 = vpack.c.b16 %v790, %v788
    %v831 = vpack.c.b16 %v793, %v791
    %v832 = vpack.c.b16 %v794, %v792
    %v833 = vpack.c.b16 %v797, %v795
    %v834 = vpack.c.b16 %v798, %v796
    %v835 = vpack.c.b16 %v801, %v799
    %v836 = vpack.c.b16 %v802, %v800
    %v837 = vpack.c.b16 %v805, %v803
    %v838 = vpack.c.b16 %v806, %v804
    %871 = vmatprep.subr.bf16.mxu0 %v808
    %872 = vmatpush1.bf16.msra.mxu0 %v807
    %873 = vmatprep.subr.bf16.mxu0 %v810
    %874 = vmatpush1.bf16.msra.mxu0 %v809
    %875 = vmatprep.subr.bf16.mxu0 %v812
    %876 = vmatpush1.bf16.msra.mxu0 %v811
    %877 = vmatprep.subr.bf16.mxu0 %v814
    %878 = vmatpush1.bf16.msra.mxu0 %v813
    %879 = vmatprep.subr.bf16.mxu0 %v816
    %880 = vmatpush1.bf16.msra.mxu0 %v815
    %881 = vmatprep.subr.bf16.mxu0 %v818
    %882 = vmatpush1.bf16.msra.mxu0 %v817
    %883 = vmatprep.subr.bf16.mxu0 %v820
    %884 = vmatpush1.bf16.msra.mxu0 %v819
    %885 = vmatprep.subr.bf16.mxu0 %v822
    %886 = vmatpush1.bf16.msra.mxu0 %v821
    %887 = vmatprep.subr.bf16.mxu0 %v824
    %888 = vmatpush1.bf16.msra.mxu0 %v823
    %889 = vmatprep.subr.bf16.mxu0 %v826
    %890 = vmatpush1.bf16.msra.mxu0 %v825
    %891 = vmatprep.subr.bf16.mxu0 %v828
    %892 = vmatpush1.bf16.msra.mxu0 %v827
    %893 = vmatprep.subr.bf16.mxu0 %v830
    %894 = vmatpush1.bf16.msra.mxu0 %v829
    %895 = vmatprep.subr.bf16.mxu0 %v832
    %896 = vmatpush1.bf16.msra.mxu0 %v831
    %897 = vmatprep.subr.bf16.mxu0 %v834
    %898 = vmatpush1.bf16.msra.mxu0 %v833
    %899 = vmatprep.subr.bf16.mxu0 %v836
    %900 = vmatpush1.bf16.msra.mxu0 %v835
    %901 = vmatprep.subr.bf16.mxu0 %v838
    %902 = vmatpush1.bf16.msra.mxu0 %v837
    %903 = vmatprep.mubr.bf16.mxu0 %v666
    %904 = vmatmul.mubr.bf16.gmra.mrb[0].mxu0 %v665
    %v905 = vpop.f32.mrb[0].mxu0
    %v906 = vadd.f32 %v704, %v905
    %v907 = vpop.f32.mrb[0].mxu0
    %v908 = vadd.f32 %v708, %v907
    %v909 = vpop.f32.mrb[0].mxu0
    %v910 = vadd.f32 %v704, %v909
    %v911 = vpop.f32.mrb[0].mxu0
    %v912 = vadd.f32 %v708, %v911
    %913 = vdwg.mxu0
    %v914 = vadd.f32 %v906, %v910
    %v915 = vrot.slane %v914, 4
    %v916 = vadd.f32 %v914, %v915
    %v917 = vrot.slane %v916, 2
    %v918 = vadd.f32 %v916, %v917
    %v919 = vrot.slane %v918, 1
    %v920 = vadd.f32 %v918, %v919
    %v921 = vadd.f32 %v908, %v912
    %v922 = vrot.slane %v921, 4
    %v923 = vadd.f32 %v921, %v922
    %v924 = vrot.slane %v923, 2
    %v925 = vadd.f32 %v923, %v924
    %v926 = vrot.slane %v925, 1
    %v927 = vadd.f32 %v925, %v926
    %v928 = vmul.f32 %v920, %v325
    %v929 = vmul.f32 %v927, %v325
    %v930 = vsub.f32 %v906, %v928
    %v931 = vsub.f32 %v908, %v929
    %v932 = vsub.f32 %v910, %v928
    %v933 = vsub.f32 %v912, %v929
    %v934 = vmul.f32 %v930, %v930
    %v935 = vmul.f32 %v931, %v931
    %v936 = vmul.f32 %v932, %v932
    %v937 = vmul.f32 %v933, %v933
    %v938 = vadd.f32 %v934, %v936
    %v939 = vrot.slane %v938, 4
    %v940 = vadd.f32 %v938, %v939
    %v941 = vrot.slane %v940, 2
    %v942 = vadd.f32 %v940, %v941
    %v943 = vrot.slane %v942, 1
    %v944 = vadd.f32 %v942, %v943
    %v945 = vadd.f32 %v935, %v937
    %v946 = vrot.slane %v945, 4
    %v947 = vadd.f32 %v945, %v946
    %v948 = vrot.slane %v947, 2
    %v949 = vadd.f32 %v947, %v948
    %v950 = vrot.slane %v949, 1
    %v951 = vadd.f32 %v949, %v950
    %v952 = vmul.f32 %v944, %v325
    %v953 = vmul.f32 %v951, %v325
    %v954 = vadd.f32 %v952, 1e-05
    %v955 = vadd.f32 %v953, 1e-05
    %v956 = vrsqrt.pop %v954
    %v957 = vrsqrt.pop %v955
    %v958 = vmul.f32 %v930, %v956
    %v959 = vmul.f32 %v931, %v957
    %v960 = vmul.f32 %v932, %v956
    %v961 = vmul.f32 %v933, %v957
    %962 = vst [vmem:[#allocation2] sm:$0xff] %v958
    %963 = vst [vmem:[#allocation2 + $0x8] sm:$0xff] %v959
    %964 = vst [vmem:[#allocation2 + $0x10] sm:$0xff] %v960
    %965 = vst [vmem:[#allocation2 + $0x18] sm:$0xff] %v961
    // Predicated region
    $region38: #{projection_wrapper_forward.1} parent=1 // pred_check
      _
    $region39: #{projection_wrapper_forward.1} parent=1 // pred_check_branch
      %967 = sbr.rel (0) target = $region41
    $region40: #{projection_wrapper_forward.1} parent=1 // pred_region
      %s969 = ssub.s32 512, 512
      %970 = vsyncadd [#allocation3], %s969
      %s971 = sshll.u32 [#allocation2], 4
      %s972 = int_to_ptr.vmem [resolvable:$true] %s971
      %977 = dma.vmem_to_hbm [thread:$0]  %s972, 512, %s9, [#allocation3], 256, 256, 16
    $region41: #{projection_wrapper_forward.1} parent=1 // pred_fallthru
      _
    // Predicated region
    $region42: #{projection_wrapper_forward.1} parent=1 // pred_check
      _
    $region43: #{projection_wrapper_forward.1} parent=1 // pred_check_branch
      %979 = sbr.rel (0) target = $region45
    $region44: #{projection_wrapper_forward.1} parent=1 // pred_region
      %s981 = ssub.s32 256, 256
      %982 = vsyncadd [#allocation5], %s981
      %s983 = sshll.u32 [#allocation4], 4
      %s984 = int_to_ptr.vmem [resolvable:$true] %s983
      %989 = dma.vmem_to_hbm [thread:$0]  %s984, 256, %s10, [#allocation5], 128, 128, 8
    $region45: #{projection_wrapper_forward.1} parent=1 // pred_fallthru
      _
    // Predicated region
    $region46: #{projection_wrapper_forward.1} parent=1 // pred_check
      _
    $region47: #{projection_wrapper_forward.1} parent=1 // pred_check_branch
      %991 = sbr.rel (0) target = $region49
    $region48: #{projection_wrapper_forward.1} parent=1 // pred_region
      %992 = dma.done [#allocation3], 512
    $region49: #{projection_wrapper_forward.1} parent=1 // pred_fallthru
      _
    // Predicated region
    $region50: #{projection_wrapper_forward.1} parent=1 // pred_check
      _
    $region51: #{projection_wrapper_forward.1} parent=1 // pred_check_branch
      %994 = sbr.rel (0) target = $region53
    $region52: #{projection_wrapper_forward.1} parent=1 // pred_region
      %995 = dma.done [#allocation5], 256
    $region53: #{projection_wrapper_forward.1} parent=1 // pred_fallthru
      _
    %996 = vsyncpa [#allocation3], 1
    %997 = vsyncpa [#allocation5], 1

</llo_original>
